<compile_context>
chip_gen: v7x
topology: tpu7x:2x2x1
jax: 0.10.0
libtpu: 0.0.40
codegen_flags: <defaults>
</compile_context>

<pallas_src>
import numpy as np
import jax
import jax.numpy as jnp
from jax import lax
from jax.experimental import pallas as pl
from jax.experimental.pallas import tpu as pltpu


def bio_embedding_onehot_kernel(idx_ref, out_ref):
    """One-hot BioEmbedding lookup as a pure VPU compare/select.

    idx_ref: (TH, B)    int32 time-major indices in [0, E]
    out_ref: (TH, B*E)  float32, row-major identical to (TH, B, E)
    """
    th, b = idx_ref.shape
    be = out_ref.shape[-1]
    e = be // b
    inv_v = jnp.float32(1.0 / e)          # weight[0] row value, folded in

    idx = idx_ref[...]                    # (TH, B) int32

    # Broadcast each batch column along a new E-wide lane group:
    #   idx_exp[h, b*E + j] = idx[h, b]
    # (small static B -> cheap lane broadcast + concat; no MXU, no reshape)
    # TODO(synk): for large B, switch to a relayout/reshape-based expansion.
    cols = [jnp.broadcast_to(idx[:, j:j + 1], (th, e)) for j in range(b)]
    idx_exp = jnp.concatenate(cols, axis=-1)            # (TH, B*E) int32

    # e_exp[h, b*E + j] = j   (embedding-dim index per lane)
    e_col = lax.broadcasted_iota(jnp.int32, (th, e), 1)
    e_exp = jnp.concatenate([e_col] * b, axis=-1)       # (TH, B*E) int32

    onehot = (idx_exp - 1 == e_exp).astype(jnp.float32)  # rows 1..E -> identity
    # idx == 0 -> padding row filled with 1/E.
    # (Indices outside [0, E] silently give all-zero rows, matching the
    #  one-hot-matmul formulation; PyTorch would raise.)
    out_ref[...] = jnp.where(idx_exp == 0, inv_v, onehot)


def make_weight(num_embeddings: int) -> np.ndarray:
    """Reference weight matching BioEmbedding._make_weight (one_hot encoding)."""
    w = np.zeros((num_embeddings + 1, num_embeddings), dtype=np.float32)
    w[0] = 1.0 / num_embeddings
    w[1:] = np.eye(num_embeddings, dtype=np.float32)
    return w


def _choose_block_rows(H: int, lane_width: int, bytes_budget: int = 2 << 20) -> int:
    """Rows per grid step: ~2 MiB f32 output blocks (v7x-safe), multiple of 8."""
    rows = max(8, bytes_budget // (lane_width * 4))
    th = min(H, rows)
    if th < H:
        th = max(8, (th // 8) * 8)
    return th


def bio_embedding_forward(inpt: jnp.ndarray, lengths, num_embeddings: int,
                          block_rows: int | None = None):
    """Forward pass of BioEmbedding (one_hot encoding).

    inpt:    (B, H) int indices in [0, num_embeddings]
    lengths: python sequence of ints, sorted descending (enforce_sorted=True)
    Returns (packed_data, batch_sizes, padded_output):
      packed_data  (sum(lengths), E) — PackedSequence.data
      batch_sizes  (max_len,) int32  — PackedSequence.batch_sizes
      padded_output (H, B, E)        — time-major embedded sequence
    """
    B, H = inpt.shape
    E = num_embeddings
    BE = B * E

    # Glue: time-major int32 indices for the kernel.
    idx_t = jnp.transpose(inpt, (1, 0)).astype(jnp.int32)   # (H, B)

    TH = block_rows if block_rows is not None else _choose_block_rows(H, BE)
    grid = (pl.cdiv(H, TH),)

    out2d = pl.pallas_call(
        bio_embedding_onehot_kernel,
        out_shape=jax.ShapeDtypeStruct((H, BE), jnp.float32),
        grid=grid,
        in_specs=[pl.BlockSpec((TH, B), lambda i: (i, 0))],
        out_specs=pl.BlockSpec((TH, BE), lambda i: (i, 0)),
        compiler_params=pltpu.CompilerParams(
            dimension_semantics=("parallel",)),       # v7x: shard H over 2 TCs
    )(idx_t)

    padded = out2d.reshape(H, B, E)                    # free row-major reshape

    # --- pack_padded_sequence glue (static lengths) -------------------------
    lengths = [int(l) for l in lengths]
    assert all(lengths[i] >= lengths[i + 1] for i in range(len(lengths) - 1)), \
        "lengths must be sorted descending (enforce_sorted=True)"
    max_len = max(lengths)
    batch_sizes = np.array(
        [sum(1 for l in lengths if l > t) for t in range(max_len)], dtype=np.int32)
    t_idx = np.concatenate([np.full(bs, t, dtype=np.int32)
                            for t, bs in enumerate(batch_sizes)])
    b_idx = np.concatenate([np.arange(bs, dtype=np.int32) for bs in batch_sizes])
    packed_data = padded[t_idx, b_idx, :]              # (sum(lengths), E)
    return packed_data, jnp.asarray(batch_sizes), padded


if __name__ == "__main__":
    num_embeddings = 4     # alphabet size -> embed_size E = 4
    B, H = 2, 8            # batch_size x max sequence length
    lengths = [8, 6]       # sorted descending

    key = jax.random.PRNGKey(0)
    # indices in [0, num_embeddings] (0 is the "unknown/pad" row)
    inpt = jax.random.randint(key, (B, H), 0, num_embeddings + 1, dtype=jnp.int32)

    packed_data, batch_sizes, padded = bio_embedding_forward(
        inpt, lengths, num_embeddings)
    jax.block_until_ready(packed_data)
    jax.block_until_ready(padded)

    # Reference check (numpy): F.embedding + transpose + pack
    w_np = make_weight(num_embeddings)
    idx_np = np.asarray(inpt)
    ref_padded = w_np[idx_np]                          # (B, H, E)
    ref_padded = np.transpose(ref_padded, (1, 0, 2))   # (H, B, E)
    np.testing.assert_allclose(np.asarray(padded), ref_padded, rtol=1e-6, atol=1e-6)

    bs_np = np.asarray(batch_sizes)
    ref_packed = np.concatenate(
        [ref_padded[t, :bs_np[t], :] for t in range(len(bs_np))], axis=0)
    np.testing.assert_allclose(np.asarray(packed_data), ref_packed,
                               rtol=1e-6, atol=1e-6)

    print("KERNEL_OK")
</pallas_src>

<mosaic_0001>
module attributes {stable_mosaic.version = 11 : i64} {
  func.func @bio_embedding_onehot_kernel(%arg0: i32, %arg1: memref<8x2xi32, #tpu.memory_space<vmem>>, %arg2: memref<8x8xf32, #tpu.memory_space<vmem>>) attributes {dimension_semantics = [#tpu.dimension_semantics<parallel>], iteration_bounds = array<i64: 1>, scalar_prefetch = 0 : i64, scratch_operands = 0 : i64, tpu.core_type = #tpu.core_type<tc>, window_params = [{transform_indices = @transform_0, window_bounds = array<i64: 8, 2>}, {transform_indices = @transform_1, window_bounds = array<i64: 8, 8>}]} {
    %c0 = arith.constant 0 : index
    %c0_0 = arith.constant 0 : index
    %0 = vector.load %arg1[%c0, %c0_0] : memref<8x2xi32, #tpu.memory_space<vmem>>, vector<8x2xi32>
    %1 = vector.extract_strided_slice %0 {offsets = [0, 0], sizes = [8, 1], strides = [1, 1]} : vector<8x2xi32> to vector<8x1xi32>
    %2 = vector.shape_cast %1 : vector<8x1xi32> to vector<8x1xi32>
    %3 = vector.broadcast %2 : vector<8x1xi32> to vector<8x4xi32>
    %4 = vector.extract_strided_slice %0 {offsets = [0, 1], sizes = [8, 1], strides = [1, 1]} : vector<8x2xi32> to vector<8x1xi32>
    %5 = vector.shape_cast %4 : vector<8x1xi32> to vector<8x1xi32>
    %6 = vector.broadcast %5 : vector<8x1xi32> to vector<8x4xi32>
    %7 = tpu.concatenate %3, %6 in 1 : vector<8x4xi32>, vector<8x4xi32> -> vector<8x8xi32>
    %8 = tpu.iota {dimensions = array<i32: 1>} : vector<8x4xi32>
    %9 = tpu.concatenate %8, %8 in 1 : vector<8x4xi32>, vector<8x4xi32> -> vector<8x8xi32>
    %c1_i32 = arith.constant 1 : i32
    %10 = vector.broadcast %c1_i32 : i32 to vector<8x8xi32>
    %11 = arith.subi %7, %10 : vector<8x8xi32>
    %12 = arith.cmpi eq, %11, %9 : vector<8x8xi32>
    %13 = arith.extui %12 : vector<8x8xi1> to vector<8x8xi32>
    %14 = arith.sitofp %13 : vector<8x8xi32> to vector<8x8xf32>
    %c0_i32 = arith.constant 0 : i32
    %15 = vector.broadcast %c0_i32 : i32 to vector<8x8xi32>
    %16 = arith.cmpi eq, %7, %15 : vector<8x8xi32>
    %cst = arith.constant 2.500000e-01 : f32
    %17 = vector.broadcast %cst : f32 to vector<8x8xf32>
    %18 = arith.select %16, %17, %14 : vector<8x8xi1>, vector<8x8xf32>
    %c0_1 = arith.constant 0 : index
    %c0_2 = arith.constant 0 : index
    %19 = vector.load %arg2[%c0_1, %c0_2] : memref<8x8xf32, #tpu.memory_space<vmem>>, vector<8x8xf32>
    tpu.vector_store %arg2[%c0_1, %c0_2], %18 {strides = array<i32>} : memref<8x8xf32, #tpu.memory_space<vmem>>, vector<8x8xf32>,
    return
  }
  func.func @transform_0(%arg0: i32) -> (i32, i32) {
    %c0_i32 = arith.constant 0 : i32
    %c0_i32_0 = arith.constant 0 : i32
    return %arg0, %c0_i32 : i32, i32
  }
  func.func @transform_1(%arg0: i32) -> (i32, i32) {
    %c0_i32 = arith.constant 0 : i32
    %c0_i32_0 = arith.constant 0 : i32
    return %arg0, %c0_i32 : i32, i32
  }
}

</mosaic_0001>

<llo_original>
// kernel: tpu_custom_call.1
$region0: #{tpu_custom_call.1}
  #allocation0 [shape = 'u32[]', space=smem, size = 0x4, offset = 0x4, fixed_abs, tag = 'smem constant byte address 0x4 - core index']
  #allocation1 [shape = 'u32[144,128]{1,0:T(1,128)}', space=vmem, size = 0x12000, scoped, tag = 'internal scratch']
  %s0 = inlined_call_operand.vmem [shape: s32[8,2], index: 0, kind: input, shape index: {}]
  %s1 = inlined_call_operand.hbm [shape: f32[8,8], index: 1, kind: output, shape index: {}]
  %s2 = sld [smem:[#allocation0]]
  $region14: #{tpu_custom_call.1} parent=0
    _
  %s4 = ssub.s32 1, %s2
  %s5 = scalar_select 0, %s4, %s2
  $region1: #{tpu_custom_call.1} parent=0
    #allocation2 [shape = 'u8[4096]{0}', space=vmem, size = 0x1000, scoped, tag = 'output window, operand 0, single buffered']
    #allocation3 [shape = 's32[1]{0}', space=sflag, size = 0x4, scoped, tag = 'scoped memory for tpu_custom_call.1']
    %6 = vsyncpa [#allocation3], 0
    // Predicated region
    $region2: #{tpu_custom_call.1} parent=1 // pred_check
      _
    $region3: #{tpu_custom_call.1} parent=1 // pred_check_branch
      %8 = sbr.rel (0) target = $region5
    $region4: #{tpu_custom_call.1} parent=1 // pred_region
      _
    $region5: #{tpu_custom_call.1} parent=1 // pred_fallthru
      _
    %v9 = vld [vmem:[%s0] sm:$0xff]
    %10 = vset.pattern.permute.xlu0 0
    %11 = vperm.xlu0 %10, %v9
    %v12 = vpop.permute.xlu0 %11
    %13 = vset.pattern.permute.xlu0 1
    %14 = vperm.xlu0 %13, %v9
    %v15 = vpop.permute.xlu0 %14
    %vm16 = vcmask 31744
    %v17 = vsel %vm16, %v12, %v15
    %v18 = vlaneseq
    %v19 = vand.u32 %v18, 127
    %20 = vrot.lane.b32.xlu0 %v19, 4
    %v21 = vpop.permute.xlu0 %20
    %v22 = vsel %vm16, %v19, %v21
    %v23 = vsub.s32 %v17, 1
    %vm24 = vcmp.eq.s32.totalorder %v23, %v22
    %v25 = vsel %vm24, 1, 0
    %v26 = vcvt.s32.f32 %v25
    %vm27 = vcmp.eq.s32.totalorder %v17, 0
    %v28 = vsel %vm27, 0.25, %v26
    %vm29 = vcmask 64512
    %30 = vst.msk [vmem:[#allocation2] sm:$0xff] %vm29, %v28
    // Predicated region
    $region6: #{tpu_custom_call.1} parent=1 // pred_check
      _
    $region7: #{tpu_custom_call.1} parent=1 // pred_check_branch
      %32 = sbr.rel (0) target = $region9
    $region8: #{tpu_custom_call.1} parent=1 // pred_region
      %s34 = ssub.s32 128, 128
      %35 = vsyncadd [#allocation3], %s34
      %s37 = sshll.u32 [#allocation2], 4
      %s38 = int_to_ptr.vmem [resolvable:$true] %s37
      %40 = dma.vmem_to_hbm [thread:$0]  %s38, 128, %s1, [#allocation3]
    $region9: #{tpu_custom_call.1} parent=1 // pred_fallthru
      _
    // Predicated region
    $region10: #{tpu_custom_call.1} parent=1 // pred_check
      _
    $region11: #{tpu_custom_call.1} parent=1 // pred_check_branch
      %42 = sbr.rel (0) target = $region13
    $region12: #{tpu_custom_call.1} parent=1 // pred_region
      %43 = dma.done [#allocation3], 128
    $region13: #{tpu_custom_call.1} parent=1 // pred_fallthru
      _
    %44 = vsyncpa [#allocation3], 1

</llo_original>
